<compile_context>
chip_gen: v7x
topology: tpu7x:2x2x1
jax: 0.10.0
libtpu: 0.0.40
codegen_flags: <defaults>
</compile_context>

<pallas_src>
import functools

import jax
import jax.numpy as jnp
import numpy as np
from jax.experimental import pallas as pl
from jax.experimental.pallas import tpu as pltpu

KH = KW = 3  # kernel_size = 3 (stride=1, circular padding=1 hard-coded)


def _conv3x3_circ_relu_kernel(x_ref, w_ref, b_ref, o_ref, im2col_ref, *, W):
    """y[n] = relu(W_mat @ im2col(x[n]) + b), spatial positions on the lane axis.

    x_ref:      (N, Cin, H*W)    f32   flattened NCHW input (lane-dense)
    w_ref:      (Cout, 9*Cin)    f32   weights, columns ordered (kh, kw, ci)
    b_ref:      (Cout, 1)        f32
    o_ref:      (N, Cout, H*W)   f32   lane-dense output
    im2col_ref: (9*Cin, H*W)     f32   VMEM scratch for the fused-K matmul
    """
    n_batch, cin, hw = x_ref.shape
    w_mat = w_ref[...]                      # (Cout, 9*Cin)
    bias = b_ref[...]                       # (Cout, 1) -> broadcasts over lanes

    # Lane coordinate (w index) used to fix up the circular wrap *within* a row
    # when the flattened spatial axis is shifted by dw = +-1.
    col = jax.lax.broadcasted_iota(jnp.int32, (cin, hw), 1) % W
    left_edge = col == 0
    right_edge = col == (W - 1)

    for n in range(n_batch):                # static unroll (small N)
        x_n = x_ref[n]                      # (Cin, H*W)
        for kh in range(KH):
            dh = kh - 1
            for kw in range(KW):
                dw = kw - 1
                # want: shifted[ci, h*W+w] = x[n, ci, (h+dh)%H, (w+dw)%W]
                # A flat roll by -(dh*W+dw) handles everything except the
                # within-row W wrap, which is fixed on one column via select.
                s = dh * W + dw
                main = pltpu.roll(x_n, shift=(-s) % hw, axis=1) if (s % hw) else x_n
                if dw == 1:      # w == W-1 must wrap to column 0 of the SAME row
                    fix = pltpu.roll(x_n, shift=(-(s - W)) % hw, axis=1)
                    shifted = jnp.where(right_edge, fix, main)
                elif dw == -1:   # w == 0 must wrap to column W-1 of the SAME row
                    fix = pltpu.roll(x_n, shift=(-(s + W)) % hw, axis=1)
                    shifted = jnp.where(left_edge, fix, main)
                else:
                    shifted = main
                tap = kh * KW + kw
                im2col_ref[pl.ds(tap * cin, cin), :] = shifted

        # Single K = 9*Cin MXU matmul per image, f32 accumulation.
        # (On v6e/v7x one could cast w_mat / im2col to bf16 here while keeping
        #  the f32 accumulator; kept f32 for exact parity with the reference.)
        acc = jnp.dot(w_mat, im2col_ref[...], preferred_element_type=jnp.float32)
        acc = acc + bias
        o_ref[n] = jnp.maximum(acc, 0.0).astype(o_ref.dtype)   # ReLU (bRelu=True)


def my_convnd_forward(x_nchw, weight_oihw, bias):
    """Pallas implementation of MyConvNd(nDIM=2, type='Conv').forward (NCHW)."""
    N, Cin, H, W = x_nchw.shape
    Cout = weight_oihw.shape[0]
    HW = H * W

    # Wrapper does *free* reshapes only (no pad / transpose HBM round trips on
    # the activations).
    x_flat = x_nchw.reshape(N, Cin, HW)
    # (Cout, Cin, KH, KW) -> (Cout, KH*KW*Cin); column order (kh, kw, ci) must
    # match the im2col row order built inside the kernel. (288-element tensor.)
    w_mat = jnp.transpose(weight_oihw, (0, 2, 3, 1)).reshape(Cout, KH * KW * Cin)
    b_col = bias.reshape(Cout, 1)

    kernel = functools.partial(_conv3x3_circ_relu_kernel, W=W)

    # Single gridless invocation: the whole (tiny) arrays live in VMEM.
    # TODO(synk): for large H/W/N, re-tile over a 'parallel' row-block grid axis
    # (with a 2-row circular halo) so v7x megacore / 64 MiB VMEM stay utilized.
    out_flat = pl.pallas_call(
        kernel,
        out_shape=jax.ShapeDtypeStruct((N, Cout, HW), x_nchw.dtype),
        scratch_shapes=[pltpu.VMEM((KH * KW * Cin, HW), jnp.float32)],
    )(x_flat, w_mat, b_col)

    return out_flat.reshape(N, Cout, H, W)


def reference_forward(x_nchw, weight_oihw, bias):
    """Pure-JAX reference: circular-pad conv2d + bias + ReLU."""
    xp = jnp.pad(x_nchw, ((0, 0), (0, 0), (1, 1), (1, 1)), mode='wrap')
    y = jax.lax.conv_general_dilated(
        xp, weight_oihw, window_strides=(1, 1), padding='VALID',
        dimension_numbers=('NCHW', 'OIHW', 'NCHW'))
    y = y + bias[None, :, None, None]
    return jnp.maximum(y, 0.0)


if __name__ == "__main__":
    # Small shapes consistent with the module: NCHW input.
    N, Cin, H, W = 2, 4, 16, 16
    Cout = 8

    key = jax.random.PRNGKey(0)
    kx, kw_, kb = jax.random.split(key, 3)

    x = jax.random.normal(kx, (N, Cin, H, W), dtype=jnp.float32)
    # Deterministic synthetic parameters (shapes as in nn.Conv2d(Cin, Cout, 3)).
    fan_in = Cin * KH * KW
    bound = 1.0 / np.sqrt(fan_in)
    weight = jax.random.uniform(kw_, (Cout, Cin, KH, KW),
                                minval=-bound, maxval=bound, dtype=jnp.float32)
    bias = jax.random.uniform(kb, (Cout,), minval=-bound, maxval=bound,
                              dtype=jnp.float32)

    out = my_convnd_forward(x, weight, bias)
    out = jax.block_until_ready(out)

    ref = jax.block_until_ready(reference_forward(x, weight, bias))
    np.testing.assert_allclose(np.asarray(out), np.asarray(ref),
                               rtol=1e-5, atol=1e-5)

    print("KERNEL_OK")
</pallas_src>

<mosaic_0001>
module attributes {stable_mosaic.version = 11 : i64} {
  func.func @_conv3x3_circ_relu_kernel(%arg0: memref<2x4x256xf32, #tpu.memory_space<vmem>>, %arg1: memref<8x36xf32, #tpu.memory_space<vmem>>, %arg2: memref<8x1xf32, #tpu.memory_space<vmem>>, %arg3: memref<2x8x256xf32, #tpu.memory_space<vmem>>, %arg4: memref<36x256xf32, #tpu.memory_space<vmem>>) attributes {dimension_semantics = [], scalar_prefetch = 0 : i64, scratch_operands = 1 : i64, tpu.core_type = #tpu.core_type<tc>} {
    %c0 = arith.constant 0 : index
    %c0_0 = arith.constant 0 : index
    %0 = vector.load %arg1[%c0, %c0_0] : memref<8x36xf32, #tpu.memory_space<vmem>>, vector<8x36xf32>
    %c0_1 = arith.constant 0 : index
    %c0_2 = arith.constant 0 : index
    %1 = vector.load %arg2[%c0_1, %c0_2] : memref<8x1xf32, #tpu.memory_space<vmem>>, vector<8x1xf32>
    %2 = tpu.iota {dimensions = array<i32: 1>} : vector<4x256xi32>
    %c16_i32 = arith.constant 16 : i32
    %c0_i32 = arith.constant 0 : i32
    %3 = arith.cmpi eq, %c16_i32, %c0_i32 : i32
    %c1_i32 = arith.constant 1 : i32
    %4 = arith.select %3, %c1_i32, %c16_i32 : i32
    %5 = vector.broadcast %4 : i32 to vector<4x256xi32>
    %6 = arith.remsi %2, %5 : vector<4x256xi32>
    %c0_i32_3 = arith.constant 0 : i32
    %7 = vector.broadcast %c0_i32_3 : i32 to vector<4x256xi32>
    %8 = arith.cmpi ne, %6, %7 : vector<4x256xi32>
    %c0_i32_4 = arith.constant 0 : i32
    %9 = vector.broadcast %c0_i32_4 : i32 to vector<4x256xi32>
    %10 = arith.cmpi slt, %6, %9 : vector<4x256xi32>
    %c0_i32_5 = arith.constant 0 : i32
    %11 = arith.cmpi slt, %4, %c0_i32_5 : i32
    %12 = vector.broadcast %11 : i1 to vector<4x256xi1>
    %13 = vector.broadcast %12 : vector<4x256xi1> to vector<4x256xi1>
    %14 = arith.xori %10, %13 : vector<4x256xi1>
    %15 = arith.andi %14, %8 : vector<4x256xi1>
    %16 = vector.broadcast %4 : i32 to vector<4x256xi32>
    %17 = arith.addi %6, %16 : vector<4x256xi32>
    %18 = arith.select %15, %17, %6 : vector<4x256xi1>, vector<4x256xi32>
    %c0_i32_6 = arith.constant 0 : i32
    %19 = vector.broadcast %c0_i32_6 : i32 to vector<4x256xi32>
    %20 = arith.cmpi eq, %18, %19 : vector<4x256xi32>
    %c15_i32 = arith.constant 15 : i32
    %21 = vector.broadcast %c15_i32 : i32 to vector<4x256xi32>
    %22 = arith.cmpi eq, %18, %21 : vector<4x256xi32>
    %c0_7 = arith.constant 0 : index
    %c0_8 = arith.constant 0 : index
    %c0_9 = arith.constant 0 : index
    %23 = vector.load %arg0[%c0_7, %c0_8, %c0_9] : memref<2x4x256xf32, #tpu.memory_space<vmem>>, vector<1x4x256xf32>
    %24 = vector.shape_cast %23 : vector<1x4x256xf32> to vector<4x256xf32>
    %c17_i32 = arith.constant 17 : i32
    %25 = tpu.dynamic_rotate %24 by %c17_i32 dim 1 : vector<4x256xf32>, i32 -> vector<4x256xf32>
    %c1_i32_10 = arith.constant 1 : i32
    %26 = tpu.dynamic_rotate %24 by %c1_i32_10 dim 1 : vector<4x256xf32>, i32 -> vector<4x256xf32>
    %27 = arith.select %20, %26, %25 : vector<4x256xi1>, vector<4x256xf32>
    %c0_11 = arith.constant 0 : index
    %c0_12 = arith.constant 0 : index
    %28 = vector.load %arg4[%c0_11, %c0_12] : memref<36x256xf32, #tpu.memory_space<vmem>>, vector<4x256xf32>
    tpu.vector_store %arg4[%c0_11, %c0_12], %27 {strides = array<i32>} : memref<36x256xf32, #tpu.memory_space<vmem>>, vector<4x256xf32>,
    %c16_i32_13 = arith.constant 16 : i32
    %29 = tpu.dynamic_rotate %24 by %c16_i32_13 dim 1 : vector<4x256xf32>, i32 -> vector<4x256xf32>
    %c4 = arith.constant 4 : index
    %c0_14 = arith.constant 0 : index
    %30 = vector.load %arg4[%c4, %c0_14] : memref<36x256xf32, #tpu.memory_space<vmem>>, vector<4x256xf32>
    tpu.vector_store %arg4[%c4, %c0_14], %29 {strides = array<i32>} : memref<36x256xf32, #tpu.memory_space<vmem>>, vector<4x256xf32>,
    %c15_i32_15 = arith.constant 15 : i32
    %31 = tpu.dynamic_rotate %24 by %c15_i32_15 dim 1 : vector<4x256xf32>, i32 -> vector<4x256xf32>
    %c31_i32 = arith.constant 31 : i32
    %32 = tpu.dynamic_rotate %24 by %c31_i32 dim 1 : vector<4x256xf32>, i32 -> vector<4x256xf32>
    %33 = arith.select %22, %32, %31 : vector<4x256xi1>, vector<4x256xf32>
    %c8 = arith.constant 8 : index
    %c0_16 = arith.constant 0 : index
    %34 = vector.load %arg4[%c8, %c0_16] : memref<36x256xf32, #tpu.memory_space<vmem>>, vector<4x256xf32>
    tpu.vector_store %arg4[%c8, %c0_16], %33 {strides = array<i32>} : memref<36x256xf32, #tpu.memory_space<vmem>>, vector<4x256xf32>,
    %c1_i32_17 = arith.constant 1 : i32
    %35 = tpu.dynamic_rotate %24 by %c1_i32_17 dim 1 : vector<4x256xf32>, i32 -> vector<4x256xf32>
    %c241_i32 = arith.constant 241 : i32
    %36 = tpu.dynamic_rotate %24 by %c241_i32 dim 1 : vector<4x256xf32>, i32 -> vector<4x256xf32>
    %37 = arith.select %20, %36, %35 : vector<4x256xi1>, vector<4x256xf32>
    %c12 = arith.constant 12 : index
    %c0_18 = arith.constant 0 : index
    %38 = vector.load %arg4[%c12, %c0_18] : memref<36x256xf32, #tpu.memory_space<vmem>>, vector<4x256xf32>
    tpu.vector_store %arg4[%c12, %c0_18], %37 {strides = array<i32>} : memref<36x256xf32, #tpu.memory_space<vmem>>, vector<4x256xf32>,
    %c16 = arith.constant 16 : index
    %c0_19 = arith.constant 0 : index
    %39 = vector.load %arg4[%c16, %c0_19] : memref<36x256xf32, #tpu.memory_space<vmem>>, vector<4x256xf32>
    tpu.vector_store %arg4[%c16, %c0_19], %24 {strides = array<i32>} : memref<36x256xf32, #tpu.memory_space<vmem>>, vector<4x256xf32>,
    %c255_i32 = arith.constant 255 : i32
    %40 = tpu.dynamic_rotate %24 by %c255_i32 dim 1 : vector<4x256xf32>, i32 -> vector<4x256xf32>
    %c15_i32_20 = arith.constant 15 : i32
    %41 = tpu.dynamic_rotate %24 by %c15_i32_20 dim 1 : vector<4x256xf32>, i32 -> vector<4x256xf32>
    %42 = arith.select %22, %41, %40 : vector<4x256xi1>, vector<4x256xf32>
    %c20 = arith.constant 20 : index
    %c0_21 = arith.constant 0 : index
    %43 = vector.load %arg4[%c20, %c0_21] : memref<36x256xf32, #tpu.memory_space<vmem>>, vector<4x256xf32>
    tpu.vector_store %arg4[%c20, %c0_21], %42 {strides = array<i32>} : memref<36x256xf32, #tpu.memory_space<vmem>>, vector<4x256xf32>,
    %c241_i32_22 = arith.constant 241 : i32
    %44 = tpu.dynamic_rotate %24 by %c241_i32_22 dim 1 : vector<4x256xf32>, i32 -> vector<4x256xf32>
    %c225_i32 = arith.constant 225 : i32
    %45 = tpu.dynamic_rotate %24 by %c225_i32 dim 1 : vector<4x256xf32>, i32 -> vector<4x256xf32>
    %46 = arith.select %20, %45, %44 : vector<4x256xi1>, vector<4x256xf32>
    %c24 = arith.constant 24 : index
    %c0_23 = arith.constant 0 : index
    %47 = vector.load %arg4[%c24, %c0_23] : memref<36x256xf32, #tpu.memory_space<vmem>>, vector<4x256xf32>
    tpu.vector_store %arg4[%c24, %c0_23], %46 {strides = array<i32>} : memref<36x256xf32, #tpu.memory_space<vmem>>, vector<4x256xf32>,
    %c240_i32 = arith.constant 240 : i32
    %48 = tpu.dynamic_rotate %24 by %c240_i32 dim 1 : vector<4x256xf32>, i32 -> vector<4x256xf32>
    %c28 = arith.constant 28 : index
    %c0_24 = arith.constant 0 : index
    %49 = vector.load %arg4[%c28, %c0_24] : memref<36x256xf32, #tpu.memory_space<vmem>>, vector<4x256xf32>
    tpu.vector_store %arg4[%c28, %c0_24], %48 {strides = array<i32>} : memref<36x256xf32, #tpu.memory_space<vmem>>, vector<4x256xf32>,
    %c239_i32 = arith.constant 239 : i32
    %50 = tpu.dynamic_rotate %24 by %c239_i32 dim 1 : vector<4x256xf32>, i32 -> vector<4x256xf32>
    %c255_i32_25 = arith.constant 255 : i32
    %51 = tpu.dynamic_rotate %24 by %c255_i32_25 dim 1 : vector<4x256xf32>, i32 -> vector<4x256xf32>
    %52 = arith.select %22, %51, %50 : vector<4x256xi1>, vector<4x256xf32>
    %c32 = arith.constant 32 : index
    %c0_26 = arith.constant 0 : index
    %53 = vector.load %arg4[%c32, %c0_26] : memref<36x256xf32, #tpu.memory_space<vmem>>, vector<4x256xf32>
    tpu.vector_store %arg4[%c32, %c0_26], %52 {strides = array<i32>} : memref<36x256xf32, #tpu.memory_space<vmem>>, vector<4x256xf32>,
    %c0_27 = arith.constant 0 : index
    %c0_28 = arith.constant 0 : index
    %54 = vector.load %arg4[%c0_27, %c0_28] : memref<36x256xf32, #tpu.memory_space<vmem>>, vector<36x256xf32>
    %cst = arith.constant dense<0.000000e+00> : vector<8x256xf32>
    %55 = tpu.matmul %0, %54, %cst {dimension_numbers = #tpu.dot_dimension_numbers<[1], [0], [0], [1], [0, 0, 1, 1], [], []>} : vector<8x36xf32>, vector<36x256xf32>, vector<8x256xf32> -> vector<8x256xf32>
    %56 = vector.broadcast %1 : vector<8x1xf32> to vector<8x256xf32>
    %57 = arith.addf %55, %56 : vector<8x256xf32>
    %cst_29 = arith.constant 0.000000e+00 : f32
    %58 = vector.broadcast %cst_29 : f32 to vector<8x256xf32>
    %59 = arith.maximumf %57, %58 : vector<8x256xf32>
    %c0_30 = arith.constant 0 : index
    %c0_31 = arith.constant 0 : index
    %c0_32 = arith.constant 0 : index
    %60 = vector.load %arg3[%c0_30, %c0_31, %c0_32] : memref<2x8x256xf32, #tpu.memory_space<vmem>>, vector<1x8x256xf32>
    %61 = vector.shape_cast %60 : vector<1x8x256xf32> to vector<8x256xf32>
    %62 = vector.shape_cast %59 : vector<8x256xf32> to vector<1x8x256xf32>
    tpu.vector_store %arg3[%c0_30, %c0_31, %c0_32], %62 {strides = array<i32>} : memref<2x8x256xf32, #tpu.memory_space<vmem>>, vector<1x8x256xf32>,
    %c1 = arith.constant 1 : index
    %c0_33 = arith.constant 0 : index
    %c0_34 = arith.constant 0 : index
    %63 = vector.load %arg0[%c1, %c0_33, %c0_34] : memref<2x4x256xf32, #tpu.memory_space<vmem>>, vector<1x4x256xf32>
    %64 = vector.shape_cast %63 : vector<1x4x256xf32> to vector<4x256xf32>
    %c17_i32_35 = arith.constant 17 : i32
    %65 = tpu.dynamic_rotate %64 by %c17_i32_35 dim 1 : vector<4x256xf32>, i32 -> vector<4x256xf32>
    %c1_i32_36 = arith.constant 1 : i32
    %66 = tpu.dynamic_rotate %64 by %c1_i32_36 dim 1 : vector<4x256xf32>, i32 -> vector<4x256xf32>
    %67 = arith.select %20, %66, %65 : vector<4x256xi1>, vector<4x256xf32>
    %c0_37 = arith.constant 0 : index
    %c0_38 = arith.constant 0 : index
    %68 = vector.load %arg4[%c0_37, %c0_38] : memref<36x256xf32, #tpu.memory_space<vmem>>, vector<4x256xf32>
    tpu.vector_store %arg4[%c0_37, %c0_38], %67 {strides = array<i32>} : memref<36x256xf32, #tpu.memory_space<vmem>>, vector<4x256xf32>,
    %c16_i32_39 = arith.constant 16 : i32
    %69 = tpu.dynamic_rotate %64 by %c16_i32_39 dim 1 : vector<4x256xf32>, i32 -> vector<4x256xf32>
    %c4_40 = arith.constant 4 : index
    %c0_41 = arith.constant 0 : index
    %70 = vector.load %arg4[%c4_40, %c0_41] : memref<36x256xf32, #tpu.memory_space<vmem>>, vector<4x256xf32>
    tpu.vector_store %arg4[%c4_40, %c0_41], %69 {strides = array<i32>} : memref<36x256xf32, #tpu.memory_space<vmem>>, vector<4x256xf32>,
    %c15_i32_42 = arith.constant 15 : i32
    %71 = tpu.dynamic_rotate %64 by %c15_i32_42 dim 1 : vector<4x256xf32>, i32 -> vector<4x256xf32>
    %c31_i32_43 = arith.constant 31 : i32
    %72 = tpu.dynamic_rotate %64 by %c31_i32_43 dim 1 : vector<4x256xf32>, i32 -> vector<4x256xf32>
    %73 = arith.select %22, %72, %71 : vector<4x256xi1>, vector<4x256xf32>
    %c8_44 = arith.constant 8 : index
    %c0_45 = arith.constant 0 : index
    %74 = vector.load %arg4[%c8_44, %c0_45] : memref<36x256xf32, #tpu.memory_space<vmem>>, vector<4x256xf32>
    tpu.vector_store %arg4[%c8_44, %c0_45], %73 {strides = array<i32>} : memref<36x256xf32, #tpu.memory_space<vmem>>, vector<4x256xf32>,
    %c1_i32_46 = arith.constant 1 : i32
    %75 = tpu.dynamic_rotate %64 by %c1_i32_46 dim 1 : vector<4x256xf32>, i32 -> vector<4x256xf32>
    %c241_i32_47 = arith.constant 241 : i32
    %76 = tpu.dynamic_rotate %64 by %c241_i32_47 dim 1 : vector<4x256xf32>, i32 -> vector<4x256xf32>
    %77 = arith.select %20, %76, %75 : vector<4x256xi1>, vector<4x256xf32>
    %c12_48 = arith.constant 12 : index
    %c0_49 = arith.constant 0 : index
    %78 = vector.load %arg4[%c12_48, %c0_49] : memref<36x256xf32, #tpu.memory_space<vmem>>, vector<4x256xf32>
    tpu.vector_store %arg4[%c12_48, %c0_49], %77 {strides = array<i32>} : memref<36x256xf32, #tpu.memory_space<vmem>>, vector<4x256xf32>,
    %c16_50 = arith.constant 16 : index
    %c0_51 = arith.constant 0 : index
    %79 = vector.load %arg4[%c16_50, %c0_51] : memref<36x256xf32, #tpu.memory_space<vmem>>, vector<4x256xf32>
    tpu.vector_store %arg4[%c16_50, %c0_51], %64 {strides = array<i32>} : memref<36x256xf32, #tpu.memory_space<vmem>>, vector<4x256xf32>,
    %c255_i32_52 = arith.constant 255 : i32
    %80 = tpu.dynamic_rotate %64 by %c255_i32_52 dim 1 : vector<4x256xf32>, i32 -> vector<4x256xf32>
    %c15_i32_53 = arith.constant 15 : i32
    %81 = tpu.dynamic_rotate %64 by %c15_i32_53 dim 1 : vector<4x256xf32>, i32 -> vector<4x256xf32>
    %82 = arith.select %22, %81, %80 : vector<4x256xi1>, vector<4x256xf32>
    %c20_54 = arith.constant 20 : index
    %c0_55 = arith.constant 0 : index
    %83 = vector.load %arg4[%c20_54, %c0_55] : memref<36x256xf32, #tpu.memory_space<vmem>>, vector<4x256xf32>
    tpu.vector_store %arg4[%c20_54, %c0_55], %82 {strides = array<i32>} : memref<36x256xf32, #tpu.memory_space<vmem>>, vector<4x256xf32>,
    %c241_i32_56 = arith.constant 241 : i32
    %84 = tpu.dynamic_rotate %64 by %c241_i32_56 dim 1 : vector<4x256xf32>, i32 -> vector<4x256xf32>
    %c225_i32_57 = arith.constant 225 : i32
    %85 = tpu.dynamic_rotate %64 by %c225_i32_57 dim 1 : vector<4x256xf32>, i32 -> vector<4x256xf32>
    %86 = arith.select %20, %85, %84 : vector<4x256xi1>, vector<4x256xf32>
    %c24_58 = arith.constant 24 : index
    %c0_59 = arith.constant 0 : index
    %87 = vector.load %arg4[%c24_58, %c0_59] : memref<36x256xf32, #tpu.memory_space<vmem>>, vector<4x256xf32>
    tpu.vector_store %arg4[%c24_58, %c0_59], %86 {strides = array<i32>} : memref<36x256xf32, #tpu.memory_space<vmem>>, vector<4x256xf32>,
    %c240_i32_60 = arith.constant 240 : i32
    %88 = tpu.dynamic_rotate %64 by %c240_i32_60 dim 1 : vector<4x256xf32>, i32 -> vector<4x256xf32>
    %c28_61 = arith.constant 28 : index
    %c0_62 = arith.constant 0 : index
    %89 = vector.load %arg4[%c28_61, %c0_62] : memref<36x256xf32, #tpu.memory_space<vmem>>, vector<4x256xf32>
    tpu.vector_store %arg4[%c28_61, %c0_62], %88 {strides = array<i32>} : memref<36x256xf32, #tpu.memory_space<vmem>>, vector<4x256xf32>,
    %c239_i32_63 = arith.constant 239 : i32
    %90 = tpu.dynamic_rotate %64 by %c239_i32_63 dim 1 : vector<4x256xf32>, i32 -> vector<4x256xf32>
    %c255_i32_64 = arith.constant 255 : i32
    %91 = tpu.dynamic_rotate %64 by %c255_i32_64 dim 1 : vector<4x256xf32>, i32 -> vector<4x256xf32>
    %92 = arith.select %22, %91, %90 : vector<4x256xi1>, vector<4x256xf32>
    %c32_65 = arith.constant 32 : index
    %c0_66 = arith.constant 0 : index
    %93 = vector.load %arg4[%c32_65, %c0_66] : memref<36x256xf32, #tpu.memory_space<vmem>>, vector<4x256xf32>
    tpu.vector_store %arg4[%c32_65, %c0_66], %92 {strides = array<i32>} : memref<36x256xf32, #tpu.memory_space<vmem>>, vector<4x256xf32>,
    %c0_67 = arith.constant 0 : index
    %c0_68 = arith.constant 0 : index
    %94 = vector.load %arg4[%c0_67, %c0_68] : memref<36x256xf32, #tpu.memory_space<vmem>>, vector<36x256xf32>
    %cst_69 = arith.constant dense<0.000000e+00> : vector<8x256xf32>
    %95 = tpu.matmul %0, %94, %cst_69 {dimension_numbers = #tpu.dot_dimension_numbers<[1], [0], [0], [1], [0, 0, 1, 1], [], []>} : vector<8x36xf32>, vector<36x256xf32>, vector<8x256xf32> -> vector<8x256xf32>
    %96 = vector.broadcast %1 : vector<8x1xf32> to vector<8x256xf32>
    %97 = arith.addf %95, %96 : vector<8x256xf32>
    %cst_70 = arith.constant 0.000000e+00 : f32
    %98 = vector.broadcast %cst_70 : f32 to vector<8x256xf32>
    %99 = arith.maximumf %97, %98 : vector<8x256xf32>
    %c1_71 = arith.constant 1 : index
    %c0_72 = arith.constant 0 : index
    %c0_73 = arith.constant 0 : index
    %100 = vector.load %arg3[%c1_71, %c0_72, %c0_73] : memref<2x8x256xf32, #tpu.memory_space<vmem>>, vector<1x8x256xf32>
    %101 = vector.shape_cast %100 : vector<1x8x256xf32> to vector<8x256xf32>
    %102 = vector.shape_cast %99 : vector<8x256xf32> to vector<1x8x256xf32>
    tpu.vector_store %arg3[%c1_71, %c0_72, %c0_73], %102 {strides = array<i32>} : memref<2x8x256xf32, #tpu.memory_space<vmem>>, vector<1x8x256xf32>,
    return
  }
}

</mosaic_0001>

<llo_original>
// kernel: tpu_custom_call.1
$region0: #{tpu_custom_call.1}
  #allocation0 [shape = 'u32[]', space=smem, size = 0x4, offset = 0x4, fixed_abs, tag = 'smem constant byte address 0x4 - core index']
  #allocation1 [shape = 'u32[144,128]{1,0:T(1,128)}', space=vmem, size = 0x12000, scoped, tag = 'internal scratch']
  #allocation2 [shape = 'f32[36,256]{1,0:T(8,128)}', space=vmem, size = 0xa000, scoped, tag = 'scratch operand']
  %s0 = inlined_call_operand.hbm [shape: f32[2,4,256], index: 0, kind: input, shape index: {}]
  %s1 = inlined_call_operand.vmem [shape: f32[8,36], index: 1, kind: input, shape index: {}]
  %s2 = inlined_call_operand.vmem [shape: f32[8,1], index: 2, kind: input, shape index: {}]
  %s3 = inlined_call_operand.hbm [shape: f32[2,8,256], index: 3, kind: output, shape index: {}]
  %s4 = sld [smem:[#allocation0]]
  $region26: #{tpu_custom_call.1} parent=0
    _
  %s6 = ssub.s32 1, %s4
  %s7 = scalar_select 0, %s6, %s4
  $region1: #{tpu_custom_call.1} parent=0
    #allocation3 [shape = 'u8[8192]{0}', space=vmem, size = 0x2000, scoped, tag = 'input window, operand 0, single buffered']
    #allocation4 [shape = 's32[1]{0}', space=sflag, size = 0x4, scoped, tag = 'scoped memory for tpu_custom_call.1']
    #allocation5 [shape = 's32[1]{0}', space=sflag, size = 0x4, scoped, tag = 'scoped memory for tpu_custom_call.1']
    #allocation6 [shape = 'u8[16384]{0}', space=vmem, size = 0x4000, scoped, tag = 'output window, operand 0, single buffered']
    %8 = vsyncpa [#allocation4], 0
    %9 = vsyncpa [#allocation5], 0
    // Predicated region
    $region2: #{tpu_custom_call.1} parent=1 // pred_check
      _
    $region3: #{tpu_custom_call.1} parent=1 // pred_check_branch
      %11 = sbr.rel (0) target = $region5
    $region4: #{tpu_custom_call.1} parent=1 // pred_region
      %s13 = ssub.s32 256, 256
      %14 = vsyncadd [#allocation4], %s13
      %s15 = sshll.u32 [#allocation3], 4
      %s16 = int_to_ptr.vmem [resolvable:$true] %s15
      %21 = dma.hbm_to_vmem [thread:$0]  %s0, 256, %s16, [#allocation4], 128, 128, 8
    $region5: #{tpu_custom_call.1} parent=1 // pred_fallthru
      _
    // Predicated region
    $region6: #{tpu_custom_call.1} parent=1 // pred_check
      _
    $region7: #{tpu_custom_call.1} parent=1 // pred_check_branch
      %23 = sbr.rel (0) target = $region9
    $region8: #{tpu_custom_call.1} parent=1 // pred_region
      _
    $region9: #{tpu_custom_call.1} parent=1 // pred_fallthru
      _
    // Predicated region
    $region10: #{tpu_custom_call.1} parent=1 // pred_check
      _
    $region11: #{tpu_custom_call.1} parent=1 // pred_check_branch
      %25 = sbr.rel (0) target = $region13
    $region12: #{tpu_custom_call.1} parent=1 // pred_region
      _
    $region13: #{tpu_custom_call.1} parent=1 // pred_fallthru
      _
    // Predicated region
    $region14: #{tpu_custom_call.1} parent=1 // pred_check
      _
    $region15: #{tpu_custom_call.1} parent=1 // pred_check_branch
      %27 = sbr.rel (0) target = $region17
    $region16: #{tpu_custom_call.1} parent=1 // pred_region
      %28 = dma.done [#allocation4], 256
    $region17: #{tpu_custom_call.1} parent=1 // pred_fallthru
      _
    %v29 = vld [vmem:[%s1] sm:$0xff]
    %v30 = vld [vmem:[%s2] sm:$0xff]
    %v31 = vlaneseq
    %v32 = vand.u32 %v31, 127
    %v33 = vadd.s32 %v32, 128
    %vm34 = vcmp.lt.s32.totalorder %v32, 0
    %v35 = vsub.s32 0, %v32
    %v36 = vsel %vm34, %v35, %v32
    %v37 = vshrl.u32 %v36, 4
    %v38 = vand.u32 %v36, 15
    %v39 = vsub.s32 0, %v38
    %v40 = vsel %vm34, %v39, %v38
    %vm41 = vcmp.lt.s32.totalorder %v33, 0
    %v42 = vsub.s32 0, %v33
    %v43 = vsel %vm41, %v42, %v33
    %v44 = vshrl.u32 %v43, 4
    %v45 = vand.u32 %v43, 15
    %v46 = vsub.s32 0, %v45
    %v47 = vsel %vm41, %v46, %v45
    %vm48 = vcmp.ne.s32.totalorder %v40, 0
    %vm49 = vcmp.ne.s32.totalorder %v47, 0
    %vm50 = vcmp.lt.s32.totalorder %v40, 0
    %vm51 = vcmp.lt.s32.totalorder %v47, 0
    %vm52 = vmand %vm50, %vm48
    %vm53 = vmand %vm51, %vm49
    %v54 = vadd.s32 %v40, 16
    %v55 = vadd.s32 %v47, 16
    %v56 = vsel %vm52, %v54, %v40
    %v57 = vsel %vm53, %v55, %v47
    %vm58 = vcmp.eq.s32.totalorder %v56, 0
    %vm59 = vcmp.eq.s32.totalorder %v57, 0
    %vm60 = vcmp.eq.s32.totalorder %v56, 15
    %vm61 = vcmp.eq.s32.totalorder %v57, 15
    %v62 = vld [vmem:[#allocation3] sm:$0xff]
    %v64 = vcombine.high %v62, %v62
    %66 = vrot.lane.b32.xlu0 %v62, 17
    %v67 = vpop.permute.xlu0 %66
    %68 = vrot.lane.b32.xlu0 %v64, 17
    %v69 = vpop.permute.xlu0 %68
    %vm70 = vcmp.lt.s32.totalorder %v32, 17
    %v71 = vsel %vm70, %v67, %v69
    %v72 = vsel %vm70, %v69, %v67
    %73 = vrot.lane.b32.xlu0 %v62, 1
    %v74 = vpop.permute.xlu0 %73
    %75 = vrot.lane.b32.xlu0 %v64, 1
    %v76 = vpop.permute.xlu0 %75
    %vm77 = vcmp.lt.s32.totalorder %v32, 1
    %v78 = vsel %vm77, %v74, %v76
    %v79 = vsel %vm77, %v76, %v74
    %v80 = vsel %vm58, %v79, %v72
    %v81 = vsel %vm59, %v78, %v71
    %82 = vst [vmem:[#allocation2] sm:$0xf] %v80
    %83 = vst [vmem:[#allocation2 + $0x8] sm:$0xf] %v81
    %84 = vrot.lane.b32.xlu0 %v62, 16
    %v85 = vpop.permute.xlu0 %84
    %86 = vrot.lane.b32.xlu0 %v64, 16
    %v87 = vpop.permute.xlu0 %86
    %vm88 = vcmp.lt.s32.totalorder %v32, 16
    %v89 = vsel %vm88, %v85, %v87
    %v90 = vsel %vm88, %v87, %v85
    %v93 = vrot.slane %v90, 4
    %v94 = vrot.slane %v89, 4
    %97 = vst [vmem:[#allocation2] sm:$0xf0] %v93
    %98 = vst [vmem:[#allocation2 + $0x8] sm:$0xf0] %v94
    %99 = vrot.lane.b32.xlu0 %v62, 15
    %v100 = vpop.permute.xlu0 %99
    %101 = vrot.lane.b32.xlu0 %v64, 15
    %v102 = vpop.permute.xlu0 %101
    %vm103 = vcmp.lt.s32.totalorder %v32, 15
    %v104 = vsel %vm103, %v100, %v102
    %v105 = vsel %vm103, %v102, %v100
    %106 = vrot.lane.b32.xlu0 %v62, 31
    %v107 = vpop.permute.xlu0 %106
    %108 = vrot.lane.b32.xlu0 %v64, 31
    %v109 = vpop.permute.xlu0 %108
    %vm110 = vcmp.lt.s32.totalorder %v32, 31
    %v111 = vsel %vm110, %v107, %v109
    %v112 = vsel %vm110, %v109, %v107
    %v113 = vsel %vm60, %v112, %v105
    %v114 = vsel %vm61, %v111, %v104
    %115 = vst [vmem:[#allocation2 + $0x10] sm:$0xf] %v113
    %116 = vst [vmem:[#allocation2 + $0x18] sm:$0xf] %v114
    %117 = vrot.lane.b32.xlu0 %v62, 113
    %v118 = vpop.permute.xlu0 %117
    %119 = vrot.lane.b32.xlu0 %v64, 113
    %v120 = vpop.permute.xlu0 %119
    %vm121 = vcmp.lt.s32.totalorder %v32, 113
    %v122 = vsel %vm121, %v118, %v120
    %v123 = vsel %vm121, %v120, %v118
    %v124 = vsel %vm58, %v122, %v79
    %v125 = vsel %vm59, %v123, %v78
    %v128 = vrot.slane %v124, 4
    %v129 = vrot.slane %v125, 4
    %132 = vst [vmem:[#allocation2 + $0x10] sm:$0xf0] %v128
    %133 = vst [vmem:[#allocation2 + $0x18] sm:$0xf0] %v129
    %134 = vst [vmem:[#allocation2 + $0x20] sm:$0xf] %v62
    %135 = vst [vmem:[#allocation2 + $0x28] sm:$0xf] %v64
    %136 = vrot.lane.b32.xlu0 %v62, 127
    %v137 = vpop.permute.xlu0 %136
    %138 = vrot.lane.b32.xlu0 %v64, 127
    %v139 = vpop.permute.xlu0 %138
    %vm140 = vcmp.lt.s32.totalorder %v32, 127
    %v141 = vsel %vm140, %v137, %v139
    %v142 = vsel %vm140, %v139, %v137
    %v143 = vsel %vm60, %v105, %v141
    %v144 = vsel %vm61, %v104, %v142
    %v147 = vrot.slane %v143, 4
    %v148 = vrot.slane %v144, 4
    %151 = vst [vmem:[#allocation2 + $0x20] sm:$0xf0] %v147
    %152 = vst [vmem:[#allocation2 + $0x28] sm:$0xf0] %v148
    %153 = vrot.lane.b32.xlu0 %v62, 97
    %v154 = vpop.permute.xlu0 %153
    %155 = vrot.lane.b32.xlu0 %v64, 97
    %v156 = vpop.permute.xlu0 %155
    %vm157 = vcmp.lt.s32.totalorder %v32, 97
    %v158 = vsel %vm157, %v154, %v156
    %v159 = vsel %vm157, %v156, %v154
    %v160 = vsel %vm58, %v158, %v122
    %v161 = vsel %vm59, %v159, %v123
    %162 = vst [vmem:[#allocation2 + $0x30] sm:$0xf] %v160
    %163 = vst [vmem:[#allocation2 + $0x38] sm:$0xf] %v161
    %164 = vrot.lane.b32.xlu0 %v62, 112
    %v165 = vpop.permute.xlu0 %164
    %166 = vrot.lane.b32.xlu0 %v64, 112
    %v167 = vpop.permute.xlu0 %166
    %vm168 = vcmp.lt.s32.totalorder %v32, 112
    %v169 = vsel %vm168, %v165, %v167
    %v170 = vsel %vm168, %v167, %v165
    %v173 = vrot.slane %v169, 4
    %v174 = vrot.slane %v170, 4
    %177 = vst [vmem:[#allocation2 + $0x30] sm:$0xf0] %v173
    %178 = vst [vmem:[#allocation2 + $0x38] sm:$0xf0] %v174
    %179 = vrot.lane.b32.xlu0 %v62, 111
    %v180 = vpop.permute.xlu0 %179
    %181 = vrot.lane.b32.xlu0 %v64, 111
    %v182 = vpop.permute.xlu0 %181
    %vm183 = vcmp.lt.s32.totalorder %v32, 111
    %v184 = vsel %vm183, %v180, %v182
    %v185 = vsel %vm183, %v182, %v180
    %v186 = vsel %vm60, %v141, %v184
    %v187 = vsel %vm61, %v142, %v185
    %188 = vst [vmem:[#allocation2 + $0x40] sm:$0xf] %v186
    %189 = vst [vmem:[#allocation2 + $0x48] sm:$0xf] %v187
    %v190 = vld [vmem:[#allocation2] sm:$0xff]
    %v191 = vld [vmem:[#allocation2 + $0x8] sm:$0xff]
    %v192 = vld [vmem:[#allocation2 + $0x10] sm:$0xff]
    %v193 = vld [vmem:[#allocation2 + $0x18] sm:$0xff]
    %v194 = vld [vmem:[#allocation2 + $0x20] sm:$0xff]
    %v195 = vld [vmem:[#allocation2 + $0x28] sm:$0xff]
    %v196 = vld [vmem:[#allocation2 + $0x30] sm:$0xff]
    %v197 = vld [vmem:[#allocation2 + $0x38] sm:$0xff]
    %v198 = vld [vmem:[#allocation2 + $0x40] sm:$0xf]
    %v199 = vld [vmem:[#allocation2 + $0x48] sm:$0xf]
    %201 = vset.pattern.permute.xlu0 0
    %202 = vperm.xlu0 %201, %v30
    %v203 = vpop.permute.xlu0 %202
    %vm205 = vcmask 293888
    %v207 = vsel %vm205, %v29, 0
    %vm209 = vcmask 1043456
    %v211 = vsel %vm209, %v198, 0
    %v214 = vsel %vm209, %v199, 0
    %216 = vmatprep.subr.mxu0 %v191
    %217 = vmatpush1.msra.mxu0 %v190
    %218 = vmatprep.subr.mxu0 %v193
    %219 = vmatpush1.msra.mxu0 %v192
    %220 = vmatprep.subr.mxu0 %v195
    %221 = vmatpush1.msra.mxu0 %v194
    %222 = vmatprep.subr.mxu0 %v197
    %223 = vmatpush1.msra.mxu0 %v196
    %224 = vmatprep.subr.mxu0 %v214
    %225 = vmatpush1.msra.mxu0 %v211
    %226 = vmatprep.subr.mxu0 0.0
    %227 = vmatpush1.msra.mxu0 0.0
    %228 = vmatprep.subr.mxu0 0.0
    %229 = vmatpush1.msra.mxu0 0.0
    %230 = vmatprep.subr.mxu0 0.0
    %231 = vmatpush1.msra.mxu0 0.0
    %232 = vmatprep.subr.mxu0 0.0
    %233 = vmatpush1.msra.mxu0 0.0
    %234 = vmatprep.subr.mxu0 0.0
    %235 = vmatpush1.msra.mxu0 0.0
    %236 = vmatprep.subr.mxu0 0.0
    %237 = vmatpush1.msra.mxu0 0.0
    %238 = vmatprep.subr.mxu0 0.0
    %239 = vmatpush1.msra.mxu0 0.0
    %240 = vmatprep.subr.mxu0 0.0
    %241 = vmatpush1.msra.mxu0 0.0
    %242 = vmatprep.subr.mxu0 0.0
    %243 = vmatpush1.msra.mxu0 0.0
    %244 = vmatprep.subr.mxu0 0.0
    %245 = vmatpush1.msra.mxu0 0.0
    %246 = vmatprep.subr.mxu0 0.0
    %247 = vmatpush1.msra.mxu0 0.0
    %248 = vmatprep.subr.mxu0 0.0
    %249 = vmatpush1.msra.mxu0 0.0
    %250 = vmatprep.subr.mxu0 0.0
    %251 = vmatpush1.msra.mxu0 0.0
    %252 = vmatprep.subr.mxu0 0.0
    %253 = vmatpush1.msra.mxu0 0.0
    %254 = vmatprep.subr.mxu0 0.0
    %255 = vmatpush1.msra.mxu0 0.0
    %256 = vmatprep.subr.mxu0 0.0
    %257 = vmatpush1.msra.mxu0 0.0
    %258 = vmatprep.subr.mxu0 0.0
    %259 = vmatpush1.msra.mxu0 0.0
    %260 = vmatprep.subr.mxu0 0.0
    %261 = vmatpush1.msra.mxu0 0.0
    %262 = vmatprep.subr.mxu0 0.0
    %263 = vmatpush1.msra.mxu0 0.0
    %264 = vmatprep.subr.mxu0 0.0
    %265 = vmatpush1.msra.mxu0 0.0
    %266 = vmatprep.subr.mxu0 0.0
    %267 = vmatpush1.msra.mxu0 0.0
    %268 = vmatprep.subr.mxu0 0.0
    %269 = vmatpush1.msra.mxu0 0.0
    %270 = vmatprep.subr.mxu0 0.0
    %271 = vmatpush1.msra.mxu0 0.0
    %272 = vmatprep.subr.mxu0 0.0
    %273 = vmatpush1.msra.mxu0 0.0
    %274 = vmatprep.subr.mxu0 0.0
    %275 = vmatpush1.msra.mxu0 0.0
    %276 = vmatprep.subr.mxu0 0.0
    %277 = vmatpush1.msra.mxu0 0.0
    %278 = vmatprep.subr.mxu0 0.0
    %279 = vmatpush1.msra.mxu0 0.0
    %280 = vmatprep.mubr.f32.mxu0 0.0
    %281 = vmatmul.mubr.f32.gmra.mrb[0].mxu0 %v207
    %v282 = vpop.f32.mrb[0].mxu0
    %v283 = vadd.f32 %v203, %v282
    %v284 = vpop.f32.mrb[0].mxu0
    %v285 = vadd.f32 %v203, %v284
    %286 = vdwg.mxu0
    %v287 = vmax.f32 %v283, 0.0
    %v288 = vmax.f32 %v285, 0.0
    %289 = vst [vmem:[#allocation6] sm:$0xff] %v287
    %290 = vst [vmem:[#allocation6 + $0x8] sm:$0xff] %v288
    %s291 = scalar_lea.vmem [#allocation3], 8
    %v292 = vld [vmem:[%s291] sm:$0xff]
    %v294 = vcombine.high %v292, %v292
    %296 = vrot.lane.b32.xlu0 %v292, 17
    %v297 = vpop.permute.xlu0 %296
    %298 = vrot.lane.b32.xlu0 %v294, 17
    %v299 = vpop.permute.xlu0 %298
    %v300 = vsel %vm70, %v297, %v299
    %v301 = vsel %vm70, %v299, %v297
    %302 = vrot.lane.b32.xlu0 %v292, 1
    %v303 = vpop.permute.xlu0 %302
    %304 = vrot.lane.b32.xlu0 %v294, 1
    %v305 = vpop.permute.xlu0 %304
    %v306 = vsel %vm77, %v303, %v305
    %v307 = vsel %vm77, %v305, %v303
    %v308 = vsel %vm58, %v307, %v301
    %v309 = vsel %vm59, %v306, %v300
    %310 = vst [vmem:[#allocation2] sm:$0xf] %v308
    %311 = vst [vmem:[#allocation2 + $0x8] sm:$0xf] %v309
    %312 = vrot.lane.b32.xlu0 %v292, 16
    %v313 = vpop.permute.xlu0 %312
    %314 = vrot.lane.b32.xlu0 %v294, 16
    %v315 = vpop.permute.xlu0 %314
    %v316 = vsel %vm88, %v313, %v315
    %v317 = vsel %vm88, %v315, %v313
    %v320 = vrot.slane %v317, 4
    %v321 = vrot.slane %v316, 4
    %324 = vst [vmem:[#allocation2] sm:$0xf0] %v320
    %325 = vst [vmem:[#allocation2 + $0x8] sm:$0xf0] %v321
    %326 = vrot.lane.b32.xlu0 %v292, 15
    %v327 = vpop.permute.xlu0 %326
    %328 = vrot.lane.b32.xlu0 %v294, 15
    %v329 = vpop.permute.xlu0 %328
    %v330 = vsel %vm103, %v327, %v329
    %v331 = vsel %vm103, %v329, %v327
    %332 = vrot.lane.b32.xlu0 %v292, 31
    %v333 = vpop.permute.xlu0 %332
    %334 = vrot.lane.b32.xlu0 %v294, 31
    %v335 = vpop.permute.xlu0 %334
    %v336 = vsel %vm110, %v333, %v335
    %v337 = vsel %vm110, %v335, %v333
    %v338 = vsel %vm60, %v337, %v331
    %v339 = vsel %vm61, %v336, %v330
    %340 = vst [vmem:[#allocation2 + $0x10] sm:$0xf] %v338
    %341 = vst [vmem:[#allocation2 + $0x18] sm:$0xf] %v339
    %342 = vrot.lane.b32.xlu0 %v292, 113
    %v343 = vpop.permute.xlu0 %342
    %344 = vrot.lane.b32.xlu0 %v294, 113
    %v345 = vpop.permute.xlu0 %344
    %v346 = vsel %vm121, %v343, %v345
    %v347 = vsel %vm121, %v345, %v343
    %v348 = vsel %vm58, %v346, %v307
    %v349 = vsel %vm59, %v347, %v306
    %v352 = vrot.slane %v348, 4
    %v353 = vrot.slane %v349, 4
    %356 = vst [vmem:[#allocation2 + $0x10] sm:$0xf0] %v352
    %357 = vst [vmem:[#allocation2 + $0x18] sm:$0xf0] %v353
    %358 = vst [vmem:[#allocation2 + $0x20] sm:$0xf] %v292
    %359 = vst [vmem:[#allocation2 + $0x28] sm:$0xf] %v294
    %360 = vrot.lane.b32.xlu0 %v292, 127
    %v361 = vpop.permute.xlu0 %360
    %362 = vrot.lane.b32.xlu0 %v294, 127
    %v363 = vpop.permute.xlu0 %362
    %v364 = vsel %vm140, %v361, %v363
    %v365 = vsel %vm140, %v363, %v361
    %v366 = vsel %vm60, %v331, %v364
    %v367 = vsel %vm61, %v330, %v365
    %v370 = vrot.slane %v366, 4
    %v371 = vrot.slane %v367, 4
    %374 = vst [vmem:[#allocation2 + $0x20] sm:$0xf0] %v370
    %375 = vst [vmem:[#allocation2 + $0x28] sm:$0xf0] %v371
    %376 = vrot.lane.b32.xlu0 %v292, 97
    %v377 = vpop.permute.xlu0 %376
    %378 = vrot.lane.b32.xlu0 %v294, 97
    %v379 = vpop.permute.xlu0 %378
    %v380 = vsel %vm157, %v377, %v379
    %v381 = vsel %vm157, %v379, %v377
    %v382 = vsel %vm58, %v380, %v346
    %v383 = vsel %vm59, %v381, %v347
    %384 = vst [vmem:[#allocation2 + $0x30] sm:$0xf] %v382
    %385 = vst [vmem:[#allocation2 + $0x38] sm:$0xf] %v383
    %386 = vrot.lane.b32.xlu0 %v292, 112
    %v387 = vpop.permute.xlu0 %386
    %388 = vrot.lane.b32.xlu0 %v294, 112
    %v389 = vpop.permute.xlu0 %388
    %v390 = vsel %vm168, %v387, %v389
    %v391 = vsel %vm168, %v389, %v387
    %v394 = vrot.slane %v390, 4
    %v395 = vrot.slane %v391, 4
    %398 = vst [vmem:[#allocation2 + $0x30] sm:$0xf0] %v394
    %399 = vst [vmem:[#allocation2 + $0x38] sm:$0xf0] %v395
    %400 = vrot.lane.b32.xlu0 %v292, 111
    %v401 = vpop.permute.xlu0 %400
    %402 = vrot.lane.b32.xlu0 %v294, 111
    %v403 = vpop.permute.xlu0 %402
    %v404 = vsel %vm183, %v401, %v403
    %v405 = vsel %vm183, %v403, %v401
    %v406 = vsel %vm60, %v364, %v404
    %v407 = vsel %vm61, %v365, %v405
    %408 = vst [vmem:[#allocation2 + $0x40] sm:$0xf] %v406
    %409 = vst [vmem:[#allocation2 + $0x48] sm:$0xf] %v407
    %v410 = vld [vmem:[#allocation2] sm:$0xff]
    %v411 = vld [vmem:[#allocation2 + $0x8] sm:$0xff]
    %v412 = vld [vmem:[#allocation2 + $0x10] sm:$0xff]
    %v413 = vld [vmem:[#allocation2 + $0x18] sm:$0xff]
    %v414 = vld [vmem:[#allocation2 + $0x20] sm:$0xff]
    %v415 = vld [vmem:[#allocation2 + $0x28] sm:$0xff]
    %v416 = vld [vmem:[#allocation2 + $0x30] sm:$0xff]
    %v417 = vld [vmem:[#allocation2 + $0x38] sm:$0xff]
    %v418 = vld [vmem:[#allocation2 + $0x40] sm:$0xf]
    %v419 = vld [vmem:[#allocation2 + $0x48] sm:$0xf]
    %v421 = vsel %vm209, %v418, 0
    %v424 = vsel %vm209, %v419, 0
    %426 = vmatprep.subr.mxu0 %v411
    %427 = vmatpush1.msra.mxu0 %v410
    %428 = vmatprep.subr.mxu0 %v413
    %429 = vmatpush1.msra.mxu0 %v412
    %430 = vmatprep.subr.mxu0 %v415
    %431 = vmatpush1.msra.mxu0 %v414
    %432 = vmatprep.subr.mxu0 %v417
    %433 = vmatpush1.msra.mxu0 %v416
    %434 = vmatprep.subr.mxu0 %v424
    %435 = vmatpush1.msra.mxu0 %v421
    %436 = vmatprep.subr.mxu0 0.0
    %437 = vmatpush1.msra.mxu0 0.0
    %438 = vmatprep.subr.mxu0 0.0
    %439 = vmatpush1.msra.mxu0 0.0
    %440 = vmatprep.subr.mxu0 0.0
    %441 = vmatpush1.msra.mxu0 0.0
    %442 = vmatprep.subr.mxu0 0.0
    %443 = vmatpush1.msra.mxu0 0.0
    %444 = vmatprep.subr.mxu0 0.0
    %445 = vmatpush1.msra.mxu0 0.0
    %446 = vmatprep.subr.mxu0 0.0
    %447 = vmatpush1.msra.mxu0 0.0
    %448 = vmatprep.subr.mxu0 0.0
    %449 = vmatpush1.msra.mxu0 0.0
    %450 = vmatprep.subr.mxu0 0.0
    %451 = vmatpush1.msra.mxu0 0.0
    %452 = vmatprep.subr.mxu0 0.0
    %453 = vmatpush1.msra.mxu0 0.0
    %454 = vmatprep.subr.mxu0 0.0
    %455 = vmatpush1.msra.mxu0 0.0
    %456 = vmatprep.subr.mxu0 0.0
    %457 = vmatpush1.msra.mxu0 0.0
    %458 = vmatprep.subr.mxu0 0.0
    %459 = vmatpush1.msra.mxu0 0.0
    %460 = vmatprep.subr.mxu0 0.0
    %461 = vmatpush1.msra.mxu0 0.0
    %462 = vmatprep.subr.mxu0 0.0
    %463 = vmatpush1.msra.mxu0 0.0
    %464 = vmatprep.subr.mxu0 0.0
    %465 = vmatpush1.msra.mxu0 0.0
    %466 = vmatprep.subr.mxu0 0.0
    %467 = vmatpush1.msra.mxu0 0.0
    %468 = vmatprep.subr.mxu0 0.0
    %469 = vmatpush1.msra.mxu0 0.0
    %470 = vmatprep.subr.mxu0 0.0
    %471 = vmatpush1.msra.mxu0 0.0
    %472 = vmatprep.subr.mxu0 0.0
    %473 = vmatpush1.msra.mxu0 0.0
    %474 = vmatprep.subr.mxu0 0.0
    %475 = vmatpush1.msra.mxu0 0.0
    %476 = vmatprep.subr.mxu0 0.0
    %477 = vmatpush1.msra.mxu0 0.0
    %478 = vmatprep.subr.mxu0 0.0
    %479 = vmatpush1.msra.mxu0 0.0
    %480 = vmatprep.subr.mxu0 0.0
    %481 = vmatpush1.msra.mxu0 0.0
    %482 = vmatprep.subr.mxu0 0.0
    %483 = vmatpush1.msra.mxu0 0.0
    %484 = vmatprep.subr.mxu0 0.0
    %485 = vmatpush1.msra.mxu0 0.0
    %486 = vmatprep.subr.mxu0 0.0
    %487 = vmatpush1.msra.mxu0 0.0
    %488 = vmatprep.subr.mxu0 0.0
    %489 = vmatpush1.msra.mxu0 0.0
    %490 = vmatprep.mubr.f32.mxu0 0.0
    %491 = vmatmul.mubr.f32.gmra.mrb[0].mxu0 %v207
    %v492 = vpop.f32.mrb[0].mxu0
    %v493 = vadd.f32 %v203, %v492
    %v494 = vpop.f32.mrb[0].mxu0
    %v495 = vadd.f32 %v203, %v494
    %496 = vdwg.mxu0
    %v497 = vmax.f32 %v493, 0.0
    %v498 = vmax.f32 %v495, 0.0
    %s499 = scalar_lea.vmem [#allocation6], 16
    %500 = vst [vmem:[%s499] sm:$0xff] %v497
    %501 = vst [vmem:[%s499 + $0x8] sm:$0xff] %v498
    // Predicated region
    $region18: #{tpu_custom_call.1} parent=1 // pred_check
      _
    $region19: #{tpu_custom_call.1} parent=1 // pred_check_branch
      %503 = sbr.rel (0) target = $region21
    $region20: #{tpu_custom_call.1} parent=1 // pred_region
      %s505 = ssub.s32 512, 512
      %506 = vsyncadd [#allocation5], %s505
      %s507 = sshll.u32 [#allocation6], 4
      %s508 = int_to_ptr.vmem [resolvable:$true] %s507
      %513 = dma.vmem_to_hbm [thread:$0]  %s508, 512, %s3, [#allocation5], 256, 256, 16
    $region21: #{tpu_custom_call.1} parent=1 // pred_fallthru
      _
    // Predicated region
    $region22: #{tpu_custom_call.1} parent=1 // pred_check
      _
    $region23: #{tpu_custom_call.1} parent=1 // pred_check_branch
      %515 = sbr.rel (0) target = $region25
    $region24: #{tpu_custom_call.1} parent=1 // pred_region
      %516 = dma.done [#allocation5], 512
    $region25: #{tpu_custom_call.1} parent=1 // pred_fallthru
      _
    %517 = vsyncpa [#allocation4], 1
    %518 = vsyncpa [#allocation5], 1

</llo_original>
